<compile_context>
chip_gen: v5e
topology: v5e:2x2
jax: 0.10.0
libtpu: 0.0.40
codegen_flags: <defaults>
</compile_context>

<pallas_src>
import jax
import jax.numpy as jnp
import numpy as np
from jax.experimental import pallas as pl
from jax.experimental.pallas import tpu as pltpu

# ---- small shapes consistent with the module (lane-dense: dim == 128 lanes) ----
B = 2            # batch
N = 8            # tokens per batch element
DIM = 128        # model dim  (== TPU lane width -> unmasked loads/stores)
HIDDEN = 256     # hidden_dim
LN_EPS = 1e-5

ROW_TILE = 256           # token rows per grid step (v6e/v7x MXU-friendly; 128 on v5e)
K_TILE = 128             # hidden-dim tile; HIDDEN=256 -> 2 k-steps exercises the accumulator
MATMUL_DTYPE = jnp.bfloat16


def feedforward_kernel(x_ref, g_ref, be_ref, w1_ref, b1_ref, w2_ref, b2_ref,
                       o_ref, ln_ref, acc_ref):
    k = pl.program_id(1)

    @pl.when(k == 0)
    def _():
        # LayerNorm — PyTorch semantics (biased variance, eps inside sqrt),
        # single-pass stats: var = E[x^2] - E[x]^2.
        x = x_ref[...].astype(jnp.float32)
        mean = jnp.mean(x, axis=-1, keepdims=True)
        var = jnp.mean(x * x, axis=-1, keepdims=True) - mean * mean
        ln = (x - mean) * jax.lax.rsqrt(var + LN_EPS) * g_ref[...] + be_ref[...]
        ln_ref[...] = ln.astype(ln_ref.dtype)        # bf16 -> full-rate MXU operand
        acc_ref[...] = jnp.zeros_like(acc_ref)

    # One hidden-dim tile: (tm, tk) = GELU(LN(x) @ w1[:, k] + b1[k]), then @ w2[k, :].
    h = jnp.dot(ln_ref[...], w1_ref[...],
                preferred_element_type=jnp.float32) + b1_ref[...]
    h = jax.nn.gelu(h, approximate=True)             # tanh GELU -> EUP, off the VALU
    acc_ref[...] += jnp.dot(h.astype(w2_ref.dtype), w2_ref[...],
                            preferred_element_type=jnp.float32)

    @pl.when(k == pl.num_programs(1) - 1)
    def _():
        o_ref[...] = (acc_ref[...] + b2_ref[...]).astype(o_ref.dtype)


def _vmem_estimate_bytes(tm, tk, d, io_bytes, w_bytes):
    dbl = 2                                           # double-buffered pipelined blocks
    x_out = 2 * tm * d * io_bytes * dbl               # x tile + out tile
    weights = (d * tk + tk * d) * w_bytes * dbl       # w1 / w2 hidden tiles
    small = (3 * d + tk) * 4 * dbl                    # gamma, beta, b2, b1 tile
    scratch = tm * d * (4 + 2)                        # f32 accumulator + bf16 LN scratch
    return x_out + weights + small + scratch


def feedforward_forward(x, params, *, row_tile=ROW_TILE, k_tile=K_TILE):
    gamma, beta, w1, b1, w2, b2 = params
    Bx, Nx, D = x.shape
    H = w1.shape[1]
    T = Bx * Nx
    tm = min(row_tile, T)
    tk = min(k_tile, H)

    # Lane-dense (T, D) slab; weights streamed as bf16 (f32 accumulation in-kernel).
    x2 = x.reshape(T, D)
    g2 = gamma.reshape(1, D).astype(jnp.float32)
    be2 = beta.reshape(1, D).astype(jnp.float32)
    w1b = w1.astype(MATMUL_DTYPE)
    b1_2 = b1.reshape(1, H).astype(jnp.float32)
    w2b = w2.astype(MATMUL_DTYPE)
    b2_2 = b2.reshape(1, D).astype(jnp.float32)

    grid = (pl.cdiv(T, tm), pl.cdiv(H, tk))           # (row tiles, hidden tiles)

    grid_spec = pltpu.PrefetchScalarGridSpec(
        num_scalar_prefetch=0,
        grid=grid,
        in_specs=[
            pl.BlockSpec((tm, D), lambda i, k: (i, 0)),    # x rows (lane-dense)
            pl.BlockSpec((1, D), lambda i, k: (0, 0)),     # LayerNorm gamma
            pl.BlockSpec((1, D), lambda i, k: (0, 0)),     # LayerNorm beta
            pl.BlockSpec((D, tk), lambda i, k: (0, k)),    # w1 hidden tile
            pl.BlockSpec((1, tk), lambda i, k: (0, k)),    # b1 hidden tile
            pl.BlockSpec((tk, D), lambda i, k: (k, 0)),    # w2 hidden tile
            pl.BlockSpec((1, D), lambda i, k: (0, 0)),     # b2
        ],
        out_specs=pl.BlockSpec((tm, D), lambda i, k: (i, 0)),
        scratch_shapes=[
            pltpu.VMEM((tm, D), MATMUL_DTYPE),   # LN(x): computed once per row tile
            pltpu.VMEM((tm, D), jnp.float32),    # f32 accumulator across hidden tiles
        ],
    )

    est = _vmem_estimate_bytes(tm, tk, D, x.dtype.itemsize, 2)
    vmem_limit = int(min(max(2 * est, 32 << 20), 64 << 20))   # headroom, <= v7x physical

    out = pl.pallas_call(
        feedforward_kernel,
        out_shape=jax.ShapeDtypeStruct((T, D), x.dtype),
        grid_spec=grid_spec,
        compiler_params=pltpu.CompilerParams(
            dimension_semantics=("parallel", "arbitrary"),   # rows independent, k reduces
            vmem_limit_bytes=vmem_limit),
    )(x2, g2, be2, w1b, b1_2, w2b, b2_2)

    return out.reshape(Bx, Nx, D)


# ---------------- pure-JAX reference (nn.GELU() exact-erf semantics) ----------------
def feedforward_reference(x, params):
    gamma, beta, w1, b1, w2, b2 = params
    m = jnp.mean(x, axis=-1, keepdims=True)
    v = jnp.mean((x - m) ** 2, axis=-1, keepdims=True)
    h = (x - m) * jax.lax.rsqrt(v + LN_EPS) * gamma + beta
    h = h @ w1 + b1
    h = jax.nn.gelu(h, approximate=False)
    return h @ w2 + b2


def make_params(key):
    k1, k2, k3, k4, k5, k6 = jax.random.split(key, 6)
    f32 = jnp.float32
    gamma = jnp.ones((DIM,), f32) + 0.05 * jax.random.normal(k1, (DIM,), f32)
    beta = 0.05 * jax.random.normal(k2, (DIM,), f32)
    w1 = 0.05 * jax.random.normal(k3, (DIM, HIDDEN), f32)
    b1 = 0.01 * jax.random.normal(k4, (HIDDEN,), f32)
    w2 = 0.05 * jax.random.normal(k5, (HIDDEN, DIM), f32)
    b2 = 0.01 * jax.random.normal(k6, (DIM,), f32)
    return (gamma, beta, w1, b1, w2, b2)


if __name__ == "__main__":
    key = jax.random.PRNGKey(0)
    kx, kp = jax.random.split(key)
    x = jax.random.normal(kx, (B, N, DIM), jnp.float32)
    params = make_params(kp)

    out = jax.block_until_ready(feedforward_forward(x, params))

    ref = feedforward_reference(x, params)
    # Tolerance relaxed vs the f32/erf version: bf16 matmul operands + tanh GELU.
    np.testing.assert_allclose(np.asarray(out), np.asarray(ref), rtol=2e-2, atol=2e-2)

    print("KERNEL_OK")
</pallas_src>

<mosaic_0001>
module attributes {stable_mosaic.version = 11 : i64} {
  func.func @feedforward_kernel(%arg0: i32, %arg1: i32, %arg2: memref<16x128xf32, #tpu.memory_space<vmem>>, %arg3: memref<1x128xf32, #tpu.memory_space<vmem>>, %arg4: memref<1x128xf32, #tpu.memory_space<vmem>>, %arg5: memref<128x128xbf16, #tpu.memory_space<vmem>>, %arg6: memref<1x128xf32, #tpu.memory_space<vmem>>, %arg7: memref<128x128xbf16, #tpu.memory_space<vmem>>, %arg8: memref<1x128xf32, #tpu.memory_space<vmem>>, %arg9: memref<16x128xf32, #tpu.memory_space<vmem>>, %arg10: memref<16x128xbf16, #tpu.memory_space<vmem>>, %arg11: memref<16x128xf32, #tpu.memory_space<vmem>>) attributes {dimension_semantics = [#tpu.dimension_semantics<parallel>, #tpu.dimension_semantics<arbitrary>], iteration_bounds = array<i64: 1, 2>, scalar_prefetch = 0 : i64, scratch_operands = 2 : i64, tpu.core_type = #tpu.core_type<tc>, window_params = [{transform_indices = @transform_0, window_bounds = array<i64: 16, 128>}, {pipeline_mode = #tpu.pipeline_mode<synchronous>, transform_indices = @transform_1, window_bounds = array<i64: 1, 128>}, {pipeline_mode = #tpu.pipeline_mode<synchronous>, transform_indices = @transform_2, window_bounds = array<i64: 1, 128>}, {transform_indices = @transform_3, window_bounds = array<i64: 128, 128>}, {transform_indices = @transform_4, window_bounds = array<i64: 1, 128>}, {transform_indices = @transform_5, window_bounds = array<i64: 128, 128>}, {pipeline_mode = #tpu.pipeline_mode<synchronous>, transform_indices = @transform_6, window_bounds = array<i64: 1, 128>}, {transform_indices = @transform_7, window_bounds = array<i64: 16, 128>}]} {
    %c0_i32 = arith.constant 0 : i32
    %0 = arith.cmpi eq, %arg1, %c0_i32 : i32
    %1 = arith.extui %0 : i1 to i32
    %c0_i32_0 = arith.constant 0 : i32
    %2 = arith.cmpi ne, %1, %c0_i32_0 : i32
    scf.if %2 {
      %c0_18 = arith.constant 0 : index
      %c0_19 = arith.constant 0 : index
      %31 = vector.load %arg2[%c0_18, %c0_19] : memref<16x128xf32, #tpu.memory_space<vmem>>, vector<16x128xf32>
      %cst_20 = arith.constant dense<0.000000e+00> : vector<16xf32>
      %32 = vector.multi_reduction <add>, %31, %cst_20 [1] : vector<16x128xf32> to vector<16xf32>
      %33 = vector.shape_cast %32 : vector<16xf32> to vector<16x1xf32>
      %cst_21 = arith.constant 1.280000e+02 : f32
      %34 = vector.broadcast %cst_21 : f32 to vector<16x1xf32>
      %35 = arith.divf %33, %34 : vector<16x1xf32>
      %36 = arith.mulf %31, %31 : vector<16x128xf32>
      %cst_22 = arith.constant dense<0.000000e+00> : vector<16xf32>
      %37 = vector.multi_reduction <add>, %36, %cst_22 [1] : vector<16x128xf32> to vector<16xf32>
      %38 = vector.shape_cast %37 : vector<16xf32> to vector<16x1xf32>
      %cst_23 = arith.constant 1.280000e+02 : f32
      %39 = vector.broadcast %cst_23 : f32 to vector<16x1xf32>
      %40 = arith.divf %38, %39 : vector<16x1xf32>
      %41 = arith.mulf %35, %35 : vector<16x1xf32>
      %42 = arith.subf %40, %41 : vector<16x1xf32>
      %43 = vector.broadcast %35 : vector<16x1xf32> to vector<16x128xf32>
      %44 = arith.subf %31, %43 : vector<16x128xf32>
      %cst_24 = arith.constant 9.99999974E-6 : f32
      %45 = vector.broadcast %cst_24 : f32 to vector<16x1xf32>
      %46 = arith.addf %42, %45 : vector<16x1xf32>
      %47 = math.rsqrt %46 : vector<16x1xf32>
      %48 = vector.broadcast %47 : vector<16x1xf32> to vector<16x128xf32>
      %49 = arith.mulf %44, %48 : vector<16x128xf32>
      %c0_25 = arith.constant 0 : index
      %c0_26 = arith.constant 0 : index
      %50 = vector.load %arg3[%c0_25, %c0_26] : memref<1x128xf32, #tpu.memory_space<vmem>>, vector<1x128xf32>
      %51 = vector.broadcast %50 : vector<1x128xf32> to vector<16x128xf32>
      %52 = arith.mulf %49, %51 : vector<16x128xf32>
      %c0_27 = arith.constant 0 : index
      %c0_28 = arith.constant 0 : index
      %53 = vector.load %arg4[%c0_27, %c0_28] : memref<1x128xf32, #tpu.memory_space<vmem>>, vector<1x128xf32>
      %54 = vector.broadcast %53 : vector<1x128xf32> to vector<16x128xf32>
      %55 = arith.addf %52, %54 : vector<16x128xf32>
      %56 = arith.truncf %55 : vector<16x128xf32> to vector<16x128xbf16>
      %c0_29 = arith.constant 0 : index
      %c0_30 = arith.constant 0 : index
      %57 = vector.load %arg10[%c0_29, %c0_30] : memref<16x128xbf16, #tpu.memory_space<vmem>>, vector<16x128xbf16>
      tpu.vector_store %arg10[%c0_29, %c0_30], %56 {strides = array<i32>} : memref<16x128xbf16, #tpu.memory_space<vmem>>, vector<16x128xbf16>,
      %cst_31 = arith.constant 0.000000e+00 : f32
      %58 = vector.broadcast %cst_31 : f32 to vector<16x128xf32>
      %c0_32 = arith.constant 0 : index
      %c0_33 = arith.constant 0 : index
      %59 = vector.load %arg11[%c0_32, %c0_33] : memref<16x128xf32, #tpu.memory_space<vmem>>, vector<16x128xf32>
      tpu.vector_store %arg11[%c0_32, %c0_33], %58 {strides = array<i32>} : memref<16x128xf32, #tpu.memory_space<vmem>>, vector<16x128xf32>,
    } else {
    }
    %c0 = arith.constant 0 : index
    %c0_1 = arith.constant 0 : index
    %3 = vector.load %arg10[%c0, %c0_1] : memref<16x128xbf16, #tpu.memory_space<vmem>>, vector<16x128xbf16>
    %c0_2 = arith.constant 0 : index
    %c0_3 = arith.constant 0 : index
    %4 = vector.load %arg5[%c0_2, %c0_3] : memref<128x128xbf16, #tpu.memory_space<vmem>>, vector<128x128xbf16>
    %cst = arith.constant dense<0.000000e+00> : vector<16x128xf32>
    %5 = tpu.matmul %3, %4, %cst {dimension_numbers = #tpu.dot_dimension_numbers<[1], [0], [0], [1], [0, 0, 1, 1], [], []>} : vector<16x128xbf16>, vector<128x128xbf16>, vector<16x128xf32> -> vector<16x128xf32>
    %c0_4 = arith.constant 0 : index
    %c0_5 = arith.constant 0 : index
    %6 = vector.load %arg6[%c0_4, %c0_5] : memref<1x128xf32, #tpu.memory_space<vmem>>, vector<1x128xf32>
    %7 = vector.broadcast %6 : vector<1x128xf32> to vector<16x128xf32>
    %8 = arith.addf %5, %7 : vector<16x128xf32>
    %9 = arith.mulf %8, %8 : vector<16x128xf32>
    %10 = arith.mulf %8, %9 : vector<16x128xf32>
    %cst_6 = arith.constant 4.471500e-02 : f32
    %11 = vector.broadcast %cst_6 : f32 to vector<16x128xf32>
    %12 = arith.mulf %11, %10 : vector<16x128xf32>
    %13 = arith.addf %8, %12 : vector<16x128xf32>
    %cst_7 = arith.constant 0.797884583 : f32
    %14 = vector.broadcast %cst_7 : f32 to vector<16x128xf32>
    %15 = arith.mulf %14, %13 : vector<16x128xf32>
    %16 = math.tanh %15 : vector<16x128xf32>
    %cst_8 = arith.constant 1.000000e+00 : f32
    %17 = vector.broadcast %cst_8 : f32 to vector<16x128xf32>
    %18 = arith.addf %17, %16 : vector<16x128xf32>
    %cst_9 = arith.constant 5.000000e-01 : f32
    %19 = vector.broadcast %cst_9 : f32 to vector<16x128xf32>
    %20 = arith.mulf %19, %18 : vector<16x128xf32>
    %21 = arith.mulf %8, %20 : vector<16x128xf32>
    %c0_10 = arith.constant 0 : index
    %c0_11 = arith.constant 0 : index
    %22 = vector.load %arg11[%c0_10, %c0_11] : memref<16x128xf32, #tpu.memory_space<vmem>>, vector<16x128xf32>
    %23 = arith.truncf %21 : vector<16x128xf32> to vector<16x128xbf16>
    %c0_12 = arith.constant 0 : index
    %c0_13 = arith.constant 0 : index
    %24 = vector.load %arg7[%c0_12, %c0_13] : memref<128x128xbf16, #tpu.memory_space<vmem>>, vector<128x128xbf16>
    %cst_14 = arith.constant dense<0.000000e+00> : vector<16x128xf32>
    %25 = tpu.matmul %23, %24, %cst_14 {dimension_numbers = #tpu.dot_dimension_numbers<[1], [0], [0], [1], [0, 0, 1, 1], [], []>} : vector<16x128xbf16>, vector<128x128xbf16>, vector<16x128xf32> -> vector<16x128xf32>
    %26 = arith.addf %22, %25 : vector<16x128xf32>
    %c0_15 = arith.constant 0 : index
    %c0_16 = arith.constant 0 : index
    %27 = vector.load %arg11[%c0_15, %c0_16] : memref<16x128xf32, #tpu.memory_space<vmem>>, vector<16x128xf32>
    tpu.vector_store %arg11[%c0_15, %c0_16], %26 {strides = array<i32>} : memref<16x128xf32, #tpu.memory_space<vmem>>, vector<16x128xf32>,
    %c1_i32 = arith.constant 1 : i32
    %28 = arith.cmpi eq, %arg1, %c1_i32 : i32
    %29 = arith.extui %28 : i1 to i32
    %c0_i32_17 = arith.constant 0 : i32
    %30 = arith.cmpi ne, %29, %c0_i32_17 : i32
    scf.if %30 {
      %c0_18 = arith.constant 0 : index
      %c0_19 = arith.constant 0 : index
      %31 = vector.load %arg11[%c0_18, %c0_19] : memref<16x128xf32, #tpu.memory_space<vmem>>, vector<16x128xf32>
      %c0_20 = arith.constant 0 : index
      %c0_21 = arith.constant 0 : index
      %32 = vector.load %arg8[%c0_20, %c0_21] : memref<1x128xf32, #tpu.memory_space<vmem>>, vector<1x128xf32>
      %33 = vector.broadcast %32 : vector<1x128xf32> to vector<16x128xf32>
      %34 = arith.addf %31, %33 : vector<16x128xf32>
      %c0_22 = arith.constant 0 : index
      %c0_23 = arith.constant 0 : index
      %35 = vector.load %arg9[%c0_22, %c0_23] : memref<16x128xf32, #tpu.memory_space<vmem>>, vector<16x128xf32>
      tpu.vector_store %arg9[%c0_22, %c0_23], %34 {strides = array<i32>} : memref<16x128xf32, #tpu.memory_space<vmem>>, vector<16x128xf32>,
    } else {
    }
    return
  }
  func.func @transform_0(%arg0: i32, %arg1: i32) -> (i32, i32) {
    %c0_i32 = arith.constant 0 : i32
    %c0_i32_0 = arith.constant 0 : i32
    return %arg0, %c0_i32 : i32, i32
  }
  func.func @transform_1(%arg0: i32, %arg1: i32) -> (i32, i32) {
    %c0_i32 = arith.constant 0 : i32
    %c0_i32_0 = arith.constant 0 : i32
    %c0_i32_1 = arith.constant 0 : i32
    return %c0_i32, %c0_i32_0 : i32, i32
  }
  func.func @transform_2(%arg0: i32, %arg1: i32) -> (i32, i32) {
    %c0_i32 = arith.constant 0 : i32
    %c0_i32_0 = arith.constant 0 : i32
    %c0_i32_1 = arith.constant 0 : i32
    return %c0_i32, %c0_i32_0 : i32, i32
  }
  func.func @transform_3(%arg0: i32, %arg1: i32) -> (i32, i32) {
    %c0_i32 = arith.constant 0 : i32
    %c0_i32_0 = arith.constant 0 : i32
    return %c0_i32, %arg1 : i32, i32
  }
  func.func @transform_4(%arg0: i32, %arg1: i32) -> (i32, i32) {
    %c0_i32 = arith.constant 0 : i32
    %c0_i32_0 = arith.constant 0 : i32
    return %c0_i32, %arg1 : i32, i32
  }
  func.func @transform_5(%arg0: i32, %arg1: i32) -> (i32, i32) {
    %c0_i32 = arith.constant 0 : i32
    %c0_i32_0 = arith.constant 0 : i32
    return %arg1, %c0_i32 : i32, i32
  }
  func.func @transform_6(%arg0: i32, %arg1: i32) -> (i32, i32) {
    %c0_i32 = arith.constant 0 : i32
    %c0_i32_0 = arith.constant 0 : i32
    %c0_i32_1 = arith.constant 0 : i32
    return %c0_i32, %c0_i32_0 : i32, i32
  }
  func.func @transform_7(%arg0: i32, %arg1: i32) -> (i32, i32) {
    %c0_i32 = arith.constant 0 : i32
    %c0_i32_0 = arith.constant 0 : i32
    return %arg0, %c0_i32 : i32, i32
  }
}

</mosaic_0001>

<llo_original>
// kernel: tpu_custom_call.1
$region0: #{tpu_custom_call.1}
  #allocation0 [shape = 'u32[]', space=smem, size = 0x4, offset = 0x4, fixed_abs, tag = 'smem constant byte address 0x4 - core index']
  #allocation1 [shape = 'u32[72,128]{1,0:T(1,128)}', space=vmem, size = 0x9000, scoped, tag = 'internal scratch']
  #allocation2 [shape = 'bf16[16,128]{1,0:T(8,128)(2,1)}', space=vmem, size = 0x1000, scoped, tag = 'scratch operand']
  #allocation3 [shape = 'f32[16,128]{1,0:T(8,128)}', space=vmem, size = 0x2000, scoped, tag = 'scratch operand']
  %s0 = inlined_call_operand.hbm [shape: f32[16,128], index: 0, kind: input, shape index: {}]
  %s1 = inlined_call_operand.hbm [shape: f32[1,128], index: 1, kind: input, shape index: {}]
  %s2 = inlined_call_operand.vmem [shape: f32[1,128], index: 2, kind: input, shape index: {}]
  %s3 = inlined_call_operand.hbm [shape: bf16[128,256], index: 3, kind: input, shape index: {}]
  %s4 = inlined_call_operand.vmem [shape: f32[1,256], index: 4, kind: input, shape index: {}]
  %s5 = inlined_call_operand.hbm [shape: bf16[256,128], index: 5, kind: input, shape index: {}]
  %s6 = inlined_call_operand.vmem [shape: f32[1,128], index: 6, kind: input, shape index: {}]
  %s7 = inlined_call_operand.hbm [shape: f32[16,128], index: 7, kind: output, shape index: {}]
  %s8 = sld [smem:[#allocation0]]
  $region85: #{tpu_custom_call.1} parent=0
    _
  %s10 = ssub.s32 1, %s8
  %s11 = scalar_select 0, %s10, %s8
  $region1: #{tpu_custom_call.1} parent=0
    #allocation4 [shape = 'u8[8192]{0}', space=vmem, size = 0x2000, scoped, tag = 'input window, operand 0, single buffered']
    #allocation5 [shape = 's32[2]{0}', space=sflag, size = 0x8, scoped, tag = 'scoped memory for tpu_custom_call.1']
    #allocation6 [shape = 's32[2]{0}', space=sflag, size = 0x8, scoped, tag = 'scoped memory for tpu_custom_call.1']
    #allocation7 [shape = 'u8[512]{0}', space=vmem, size = 0x400, scoped, tag = 'input window, operand 1, single buffered']
    #allocation8 [shape = 's32[1]{0}', space=sflag, size = 0x4, scoped, tag = 'scoped memory for tpu_custom_call.1']
    #allocation9 [shape = 'u8[65536]{0}', space=vmem, size = 0x10000, scoped, tag = 'input window, operand 3']
    #allocation10 [shape = 'u8[65536]{0}', space=vmem, size = 0x10000, scoped, tag = 'input window, operand 5']
    #allocation11 [shape = 'u8[8192]{0}', space=vmem, size = 0x2000, scoped, tag = 'output window, operand 0, single buffered']
    %12 = vsyncpa [#allocation5], 0
    %13 = vsyncpa [#allocation8], 0
    %14 = vsyncpa [#allocation6], 0
    loop: start=0, step=1, limit=4
    $region2: #{tpu_custom_call.1} parent=1 // loop_pre_header
      _
    $region3: #{tpu_custom_call.1} parent=1 // loop_header
      %s16 = sphi 0, %s20
      %p17 = scmp.ge.s32.totalorder %s16, 4
      %s23 = sphi 0, %s35
      %s24 = sphi 0, %s31
      %s25 = sphi 0, %s23
      %s26 = sphi 0, %s24
      %s27 = sphi 0, %s25
      %s28 = sphi 0, %s26
      %s38 = sphi 0, %s40
      %s41 = sphi 0, %s38
      %s42 = sphi 0, %s41
      %s58 = sphi 0, %s42
      %s62 = sphi 0, %s62
      %s64 = sphi 0, %s62
      %s65 = sphi 0, %s64
      %s79 = sphi 0, %s65
      %s83 = sphi 0, %s83
      %s85 = sphi 0, %s83
      %s86 = sphi 0, %s85
      %s100 = sphi 0, %s86
      %s106 = sphi 0, %s108
      %s109 = sphi 0, %s106
      %s110 = sphi 0, %s109
      %s126 = sphi 0, %s110
      %s132 = sphi 0, %s134
      %s135 = sphi 0, %s132
      %s136 = sphi 0, %s135
      %s152 = sphi 0, %s136
      %s158 = sphi 0, %s160
      %s161 = sphi 0, %s158
      %s162 = sphi 0, %s161
      %s178 = sphi 0, %s162
      %s182 = sphi 0, %s182
      %s184 = sphi 0, %s182
      %s185 = sphi 0, %s184
      %s199 = sphi 0, %s185
      %s205 = sphi 0, %s207
      %s208 = sphi 0, %s205
      %s209 = sphi 0, %s208
      %s225 = sphi 0, %s209
    $region4: #{tpu_custom_call.1} parent=1 // loop_header_branch
      %19 = sbr.rel (%p17) target = $region8
    $region5: #{tpu_custom_call.1} parent=1 // loop_body
      %s21 = ssub.s32 %s16, 1
      %s22 = ssub.s32 %s16, 2
      %s29 = sadd.s32 1, %s24
      %p30 = scmp.ge.s32.totalorder %s29, 2
      %s31 = scalar_select %p30, 0, %s29
      %s32 = sadd.s32 1, %s23
      %s33 = scalar_select %p30, %s32, %s23
      %p34 = scmp.ge.s32.totalorder %s33, 1
      %s35 = scalar_select %p34, 0, %s33
      %s36 = ssub.s32 %s23, %s35
      %p37 = scmp.eq.s32.totalorder %s36, 0
      %s39 = sadd.s32 %s38, 1
      %s40 = scalar_select %p37, %s38, %s39
      %p43 = pneg %p37
      %p44 = scmp.eq.s32.totalorder %s16, 1
      %p45 = por %p43, %p44
      %p46 = scmp.ne.s32.totalorder %s38, %s41
      %p47 = scmp.eq.s32.totalorder %s16, 0
      %p48 = por %p46, %p47
      %p49 = scmp.ne.s32.totalorder %s38, %s41
      %p50 = scmp.eq.s32.totalorder %s21, 1
      %p51 = por %p49, %p50
      %p52 = scmp.ne.s32.totalorder %s41, %s42
      %p53 = scmp.eq.s32.totalorder %s21, 0
      %p54 = por %p52, %p53
      %p55 = scmp.ne.s32.totalorder %s41, %s42
      %p56 = scmp.eq.s32.totalorder %s22, 1
      %p57 = por %p55, %p56
      %p59 = scmp.ne.s32.totalorder %s42, %s58
      %p60 = scmp.eq.s32.totalorder %s22, 0
      %p61 = por %p59, %p60
      %s63 = sadd.s32 %s62, 1
      %p66 = scmp.eq.s32.totalorder %s16, 1
      %p67 = scmp.ne.s32.totalorder %s62, %s64
      %p68 = scmp.eq.s32.totalorder %s16, 0
      %p69 = por %p67, %p68
      %p70 = scmp.ne.s32.totalorder %s62, %s64
      %p71 = scmp.eq.s32.totalorder %s21, 1
      %p72 = por %p70, %p71
      %p73 = scmp.ne.s32.totalorder %s64, %s65
      %p74 = scmp.eq.s32.totalorder %s21, 0
      %p75 = por %p73, %p74
      %p76 = scmp.ne.s32.totalorder %s64, %s65
      %p77 = scmp.eq.s32.totalorder %s22, 1
      %p78 = por %p76, %p77
      %p80 = scmp.ne.s32.totalorder %s65, %s79
      %p81 = scmp.eq.s32.totalorder %s22, 0
      %p82 = por %p80, %p81
      %s84 = sadd.s32 %s83, 1
      %p87 = scmp.eq.s32.totalorder %s16, 1
      %p88 = scmp.ne.s32.totalorder %s83, %s85
      %p89 = scmp.eq.s32.totalorder %s16, 0
      %p90 = por %p88, %p89
      %p91 = scmp.ne.s32.totalorder %s83, %s85
      %p92 = scmp.eq.s32.totalorder %s21, 1
      %p93 = por %p91, %p92
      %p94 = scmp.ne.s32.totalorder %s85, %s86
      %p95 = scmp.eq.s32.totalorder %s21, 0
      %p96 = por %p94, %p95
      %p97 = scmp.ne.s32.totalorder %s85, %s86
      %p98 = scmp.eq.s32.totalorder %s22, 1
      %p99 = por %p97, %p98
      %p101 = scmp.ne.s32.totalorder %s86, %s100
      %p102 = scmp.eq.s32.totalorder %s22, 0
      %p103 = por %p101, %p102
      %s104 = ssub.s32 %s24, %s31
      %p105 = scmp.eq.s32.totalorder %s104, 0
      %s107 = sadd.s32 %s106, 1
      %s108 = scalar_select %p105, %s106, %s107
      %p111 = pneg %p105
      %p112 = scmp.eq.s32.totalorder %s16, 1
      %p113 = por %p111, %p112
      %p114 = scmp.ne.s32.totalorder %s106, %s109
      %p115 = scmp.eq.s32.totalorder %s16, 0
      %p116 = por %p114, %p115
      %p117 = scmp.ne.s32.totalorder %s106, %s109
      %p118 = scmp.eq.s32.totalorder %s21, 1
      %p119 = por %p117, %p118
      %p120 = scmp.ne.s32.totalorder %s109, %s110
      %p121 = scmp.eq.s32.totalorder %s21, 0
      %p122 = por %p120, %p121
      %p123 = scmp.ne.s32.totalorder %s109, %s110
      %p124 = scmp.eq.s32.totalorder %s22, 1
      %p125 = por %p123, %p124
      %p127 = scmp.ne.s32.totalorder %s110, %s126
      %p128 = scmp.eq.s32.totalorder %s22, 0
      %p129 = por %p127, %p128
      %s130 = ssub.s32 %s24, %s31
      %p131 = scmp.eq.s32.totalorder %s130, 0
      %s133 = sadd.s32 %s132, 1
      %s134 = scalar_select %p131, %s132, %s133
      %p137 = pneg %p131
      %p138 = scmp.eq.s32.totalorder %s16, 1
      %p139 = por %p137, %p138
      %p140 = scmp.ne.s32.totalorder %s132, %s135
      %p141 = scmp.eq.s32.totalorder %s16, 0
      %p142 = por %p140, %p141
      %p143 = scmp.ne.s32.totalorder %s132, %s135
      %p144 = scmp.eq.s32.totalorder %s21, 1
      %p145 = por %p143, %p144
      %p146 = scmp.ne.s32.totalorder %s135, %s136
      %p147 = scmp.eq.s32.totalorder %s21, 0
      %p148 = por %p146, %p147
      %p149 = scmp.ne.s32.totalorder %s135, %s136
      %p150 = scmp.eq.s32.totalorder %s22, 1
      %p151 = por %p149, %p150
      %p153 = scmp.ne.s32.totalorder %s136, %s152
      %p154 = scmp.eq.s32.totalorder %s22, 0
      %p155 = por %p153, %p154
      %s156 = ssub.s32 %s24, %s31
      %p157 = scmp.eq.s32.totalorder %s156, 0
      %s159 = sadd.s32 %s158, 1
      %s160 = scalar_select %p157, %s158, %s159
      %p163 = pneg %p157
      %p164 = scmp.eq.s32.totalorder %s16, 1
      %p165 = por %p163, %p164
      %p166 = scmp.ne.s32.totalorder %s158, %s161
      %p167 = scmp.eq.s32.totalorder %s16, 0
      %p168 = por %p166, %p167
      %p169 = scmp.ne.s32.totalorder %s158, %s161
      %p170 = scmp.eq.s32.totalorder %s21, 1
      %p171 = por %p169, %p170
      %p172 = scmp.ne.s32.totalorder %s161, %s162
      %p173 = scmp.eq.s32.totalorder %s21, 0
      %p174 = por %p172, %p173
      %p175 = scmp.ne.s32.totalorder %s161, %s162
      %p176 = scmp.eq.s32.totalorder %s22, 1
      %p177 = por %p175, %p176
      %p179 = scmp.ne.s32.totalorder %s162, %s178
      %p180 = scmp.eq.s32.totalorder %s22, 0
      %p181 = por %p179, %p180
      %s183 = sadd.s32 %s182, 1
      %p186 = scmp.eq.s32.totalorder %s16, 1
      %p187 = scmp.ne.s32.totalorder %s182, %s184
      %p188 = scmp.eq.s32.totalorder %s16, 0
      %p189 = por %p187, %p188
      %p190 = scmp.ne.s32.totalorder %s182, %s184
      %p191 = scmp.eq.s32.totalorder %s21, 1
      %p192 = por %p190, %p191
      %p193 = scmp.ne.s32.totalorder %s184, %s185
      %p194 = scmp.eq.s32.totalorder %s21, 0
      %p195 = por %p193, %p194
      %p196 = scmp.ne.s32.totalorder %s184, %s185
      %p197 = scmp.eq.s32.totalorder %s22, 1
      %p198 = por %p196, %p197
      %p200 = scmp.ne.s32.totalorder %s185, %s199
      %p201 = scmp.eq.s32.totalorder %s22, 0
      %p202 = por %p200, %p201
      %s203 = ssub.s32 %s23, %s35
      %p204 = scmp.eq.s32.totalorder %s203, 0
      %s206 = sadd.s32 %s205, 1
      %s207 = scalar_select %p204, %s205, %s206
      %p210 = pneg %p204
      %p211 = scmp.eq.s32.totalorder %s16, 1
      %p212 = por %p210, %p211
      %p213 = scmp.ne.s32.totalorder %s205, %s208
      %p214 = scmp.eq.s32.totalorder %s16, 0
      %p215 = por %p213, %p214
      %p216 = scmp.ne.s32.totalorder %s205, %s208
      %p217 = scmp.eq.s32.totalorder %s21, 1
      %p218 = por %p216, %p217
      %p219 = scmp.ne.s32.totalorder %s208, %s209
      %p220 = scmp.eq.s32.totalorder %s21, 0
      %p221 = por %p219, %p220
      %p222 = scmp.ne.s32.totalorder %s208, %s209
      %p223 = scmp.eq.s32.totalorder %s22, 1
      %p224 = por %p222, %p223
      %p226 = scmp.ne.s32.totalorder %s209, %s225
      %p227 = scmp.eq.s32.totalorder %s22, 0
      %p228 = por %p226, %p227
      %p229 = scmp.le.s32.totalorder 1, %s16
      %p230 = scmp.lt.s32.totalorder %s16, 3
      %p231 = pnand %p229, %p230
      %p232 = pneg %p231
      // Predicated region
      $region9: #{tpu_custom_call.1} parent=5 // pred_check
        _
      $region10: #{tpu_custom_call.1} parent=5 // pred_check_branch
        %234 = sbr.rel (%p231) target = $region12
      $region11: #{tpu_custom_call.1} parent=5 // pred_region
        %s235 = ssub.s32 %s16, 1
        // Predicated region
        $region13: #{tpu_custom_call.1} parent=11 // pred_check
          %p236 = pneg %p54
        $region14: #{tpu_custom_call.1} parent=11 // pred_check_branch
          %238 = sbr.rel (%p236) target = $region16
        $region15: #{tpu_custom_call.1} parent=11 // pred_region
          %s239 = smul.u32 2, %s25
          %241 = vsyncadd [#allocation5], 0
          %s242 = smul.addr %s239, 8
          %s243 = scalar_lea.hbm %s0, %s242
          %s244 = sshll.u32 %s243, 4
          %s245 = int_to_ptr.hbm [resolvable:$true] %s244
          %s246 = sshll.u32 [#allocation4], 4
          %s247 = int_to_ptr.vmem [resolvable:$true] %s246
          %252 = dma.hbm_to_vmem [thread:$0]  %s245, 256, %s247, [#allocation5], 128, 128, 8
        $region16: #{tpu_custom_call.1} parent=11 // pred_fallthru
          _
        // Predicated region
        $region17: #{tpu_custom_call.1} parent=11 // pred_check
          %p253 = pneg %p75
        $region18: #{tpu_custom_call.1} parent=11 // pred_check_branch
          %255 = sbr.rel (%p253) target = $region20
        $region19: #{tpu_custom_call.1} parent=11 // pred_region
          %257 = vsyncadd [#allocation8], 0
          %s259 = sshll.u32 %s1, 4
          %s260 = int_to_ptr.hbm [resolvable:$true] %s259
          %s261 = sshll.u32 [#allocation7], 4
          %s262 = int_to_ptr.vmem [resolvable:$true] %s261
          %264 = dma.hbm_to_vmem [thread:$0]  %s260, 16, %s262, [#allocation8]
        $region20: #{tpu_custom_call.1} parent=11 // pred_fallthru
          _
        // Predicated region
        $region21: #{tpu_custom_call.1} parent=11 // pred_check
          %p265 = pneg %p96
        $region22: #{tpu_custom_call.1} parent=11 // pred_check_branch
          %267 = sbr.rel (%p265) target = $region24
        $region23: #{tpu_custom_call.1} parent=11 // pred_region
          _
        $region24: #{tpu_custom_call.1} parent=11 // pred_fallthru
          _
        // Predicated region
        $region25: #{tpu_custom_call.1} parent=11 // pred_check
          %p268 = pneg %p195
        $region26: #{tpu_custom_call.1} parent=11 // pred_check_branch
          %270 = sbr.rel (%p268) target = $region28
        $region27: #{tpu_custom_call.1} parent=11 // pred_region
          _
        $region28: #{tpu_custom_call.1} parent=11 // pred_fallthru
          _
      $region12: #{tpu_custom_call.1} parent=5 // pred_fallthru
        _
      %p271 = scmp.lt.s32.totalorder %s16, 2
      // Predicated region
      $region29: #{tpu_custom_call.1} parent=5 // pred_check
        %p272 = pneg %p271
      $region30: #{tpu_custom_call.1} parent=5 // pred_check_branch
        %274 = sbr.rel (%p272) target = $region32
      $region31: #{tpu_custom_call.1} parent=5 // pred_region
        // Predicated region
        $region33: #{tpu_custom_call.1} parent=31 // pred_check
          %p275 = pneg %p116
        $region34: #{tpu_custom_call.1} parent=31 // pred_check_branch
          %277 = sbr.rel (%p275) target = $region36
        $region35: #{tpu_custom_call.1} parent=31 // pred_region
          %s278 = sand.u32 %s16, 1
          %s279 = scalar_lea.sflag [#allocation5], %s278
          %s280 = sand.u32 %s106, 1
          %s281 = smul.addr %s280, 64
          %s282 = scalar_lea.vmem [#allocation9], %s281
          %284 = vsyncadd %s279, 0
          %s285 = smul.addr %s24, 4
          %s286 = scalar_lea.hbm %s3, %s285
          %s287 = sshll.u32 %s286, 4
          %s288 = int_to_ptr.hbm [resolvable:$true] %s287
          %s289 = sshll.u32 %s282, 4
          %s290 = int_to_ptr.vmem [resolvable:$true] %s289
          %295 = dma.hbm_to_vmem [thread:$0]  %s288, 1024, %s290, %s279, 128, 64, 4
        $region36: #{tpu_custom_call.1} parent=31 // pred_fallthru
          _
        // Predicated region
        $region37: #{tpu_custom_call.1} parent=31 // pred_check
          %p296 = pneg %p142
        $region38: #{tpu_custom_call.1} parent=31 // pred_check_branch
          %298 = sbr.rel (%p296) target = $region40
        $region39: #{tpu_custom_call.1} parent=31 // pred_region
          %p299 = scmp.lt.s32.totalorder %s24, 1
          %s300 = scalar_select %p299, %s24, 1
          %s301 = scalar_lea.vmem %s4, %s300
        $region40: #{tpu_custom_call.1} parent=31 // pred_fallthru
          _
        // Predicated region
        $region41: #{tpu_custom_call.1} parent=31 // pred_check
          %p302 = pneg %p168
        $region42: #{tpu_custom_call.1} parent=31 // pred_check_branch
          %304 = sbr.rel (%p302) target = $region44
        $region43: #{tpu_custom_call.1} parent=31 // pred_region
          %s305 = sand.u32 %s16, 1
          %s306 = scalar_lea.sflag [#allocation5], %s305
          %s307 = sand.u32 %s158, 1
          %s308 = smul.addr %s307, 64
          %s309 = scalar_lea.vmem [#allocation10], %s308
          %s310 = smul.u32 16, %s24
          %312 = vsyncadd %s306, 0
          %s313 = smul.addr %s310, 4
          %s314 = scalar_lea.hbm %s5, %s313
          %s315 = sshll.u32 %s314, 4
          %s316 = int_to_ptr.hbm [resolvable:$true] %s315
          %s317 = sshll.u32 %s309, 4
          %s318 = int_to_ptr.vmem [resolvable:$true] %s317
          %323 = dma.hbm_to_vmem [thread:$0]  %s316, 1024, %s318, %s306, 64, 64, 4
        $region44: #{tpu_custom_call.1} parent=31 // pred_fallthru
          _
      $region32: #{tpu_custom_call.1} parent=5 // pred_fallthru
        _
      %p324 = scmp.le.s32.totalorder 1, %s16
      %p325 = scmp.lt.s32.totalorder %s16, 3
      %p326 = pnand %p324, %p325
      %p327 = pneg %p326
      // Predicated region
      $region45: #{tpu_custom_call.1} parent=5 // pred_check
        _
      $region46: #{tpu_custom_call.1} parent=5 // pred_check_branch
        %329 = sbr.rel (%p326) target = $region48
      $region47: #{tpu_custom_call.1} parent=5 // pred_region
        %s330 = ssub.s32 %s16, 1
        // Predicated region
        $region49: #{tpu_custom_call.1} parent=47 // pred_check
          %p331 = pneg %p54
        $region50: #{tpu_custom_call.1} parent=47 // pred_check_branch
          %333 = sbr.rel (%p331) target = $region52
        $region51: #{tpu_custom_call.1} parent=47 // pred_region
          %335 = dma.done [#allocation5], 256
        $region52: #{tpu_custom_call.1} parent=47 // pred_fallthru
          _
        // Predicated region
        $region53: #{tpu_custom_call.1} parent=47 // pred_check
          %p336 = pneg %p75
        $region54: #{tpu_custom_call.1} parent=47 // pred_check_branch
          %338 = sbr.rel (%p336) target = $region56
        $region55: #{tpu_custom_call.1} parent=47 // pred_region
          %340 = dma.done [#allocation8], 16
        $region56: #{tpu_custom_call.1} parent=47 // pred_fallthru
          _
        %s341 = sand.u32 %s21, 1
        %s342 = scalar_lea.sflag [#allocation5], %s341
        %s343 = sand.u32 %s109, 1
        %s344 = smul.addr %s343, 64
        %s345 = scalar_lea.vmem [#allocation9], %s344
        // Predicated region
        $region57: #{tpu_custom_call.1} parent=47 // pred_check
          %p346 = pneg %p122
        $region58: #{tpu_custom_call.1} parent=47 // pred_check_branch
          %348 = sbr.rel (%p346) target = $region60
        $region59: #{tpu_custom_call.1} parent=47 // pred_region
          %350 = dma.done %s342, 1024
        $region60: #{tpu_custom_call.1} parent=47 // pred_fallthru
          _
        %s351 = sand.u32 %s21, 1
        %s352 = scalar_lea.sflag [#allocation5], %s351
        %s353 = sand.u32 %s161, 1
        %s354 = smul.addr %s353, 64
        %s355 = scalar_lea.vmem [#allocation10], %s354
        // Predicated region
        $region61: #{tpu_custom_call.1} parent=47 // pred_check
          %p356 = pneg %p174
        $region62: #{tpu_custom_call.1} parent=47 // pred_check_branch
          %358 = sbr.rel (%p356) target = $region64
        $region63: #{tpu_custom_call.1} parent=47 // pred_region
          %360 = dma.done %s352, 1024
        $region64: #{tpu_custom_call.1} parent=47 // pred_fallthru
          _
        %p361 = pneg %p54
        %p362 = pneg %p51
        %p363 = pneg %p75
        %p364 = pneg %p72
        %p365 = pneg %p96
        %p366 = pneg %p93
        %s367 = sand.u32 %s21, 1
        %s368 = scalar_lea.sflag [#allocation5], %s367
        %s369 = sand.u32 %s109, 1
        %s370 = smul.addr %s369, 64
        %s371 = scalar_lea.vmem [#allocation9], %s370
        %p372 = pneg %p122
        %p373 = pneg %p119
        %p374 = scmp.lt.s32.totalorder %s26, 1
        %s375 = scalar_select %p374, %s26, 1
        %s376 = scalar_lea.vmem %s4, %s375
        %p377 = pneg %p148
        %p378 = pneg %p145
        %s379 = sand.u32 %s21, 1
        %s380 = scalar_lea.sflag [#allocation5], %s379
        %s381 = sand.u32 %s161, 1
        %s382 = smul.addr %s381, 64
        %s383 = scalar_lea.vmem [#allocation10], %s382
        %p384 = pneg %p174
        %p385 = pneg %p171
        %p386 = pneg %p195
        %p387 = pneg %p192
        %p388 = pneg %p221
        %p389 = pneg %p218
        %s390 = smul.u32 2, %s25
        %p391 = scmp.lt.s32.totalorder %s26, 1
        %s392 = scalar_select %p391, %s26, 1
        %s393 = scalar_lea.vmem %s4, %s392
        %s394 = smul.u32 16, %s26
        %s395 = smul.u32 2, %s25
        %p396 = scmp.eq.s32.totalorder %s26, 0
        // Predicated region
        $region65: #{tpu_custom_call.1} parent=47 // pred_check
          %p397 = pneg %p396
        $region66: #{tpu_custom_call.1} parent=47 // pred_check_branch
          %399 = sbr.rel (%p397) target = $region68
        $region67: #{tpu_custom_call.1} parent=47 // pred_region
          %v400 = vld [vmem:[#allocation4] sm:$0xff]
          %v401 = vld [vmem:[#allocation4 + $0x8] sm:$0xff]
          %402 = vadd.xlane.f32.xlu0 %v400
          %v403 = vpop.xlane.xlu0 %402
          %404 = vadd.xlane.f32.xlu0 %v401
          %v405 = vpop.xlane.xlu0 %404
          %v406 = vrcp.pop 128.0
          %v407 = vmul.f32 128.0, %v406
          %v408 = vsub.f32 1.0, %v407
          %v409 = vmul.f32 %v406, %v408
          %v410 = vadd.f32 %v406, %v409
          %vm411 = vweird.f32 %v406
          %v412 = vsel %vm411, %v406, %v410
          %v413 = vmul.f32 %v403, %v412
          %v414 = vmul.f32 %v405, %v412
          %v415 = vmul.f32 %v400, %v400
          %v416 = vmul.f32 %v401, %v401
          %417 = vadd.xlane.f32.xlu0 %v415
          %v418 = vpop.xlane.xlu0 %417
          %419 = vadd.xlane.f32.xlu0 %v416
          %v420 = vpop.xlane.xlu0 %419
          %v421 = vmul.f32 %v418, %v412
          %v422 = vmul.f32 %v420, %v412
          %v423 = vmul.f32 %v413, %v413
          %v424 = vmul.f32 %v414, %v414
          %v425 = vsub.f32 %v421, %v423
          %v426 = vsub.f32 %v422, %v424
          %v427 = vsub.f32 %v400, %v413
          %v428 = vsub.f32 %v401, %v414
          %v429 = vadd.f32 %v425, 1e-05
          %v430 = vadd.f32 %v426, 1e-05
          %v431 = vrsqrt.pop %v429
          %v432 = vmul.f32 %v431, %v429
          %v433 = vmul.f32 %v432, %v431
          %v434 = vmul.f32 0.5, %v433
          %v435 = vsub.f32 1.5, %v434
          %v436 = vmul.f32 %v431, %v435
          %vm437 = vweird.f32 %v429
          %vm438 = vweird.f32 %v431
          %vm439 = vmor %vm437, %vm438
          %v440 = vsel %vm439, %v431, %v436
          %v441 = vrsqrt.pop %v430
          %v442 = vmul.f32 %v441, %v430
          %v443 = vmul.f32 %v442, %v441
          %v444 = vmul.f32 0.5, %v443
          %v445 = vsub.f32 1.5, %v444
          %v446 = vmul.f32 %v441, %v445
          %vm447 = vweird.f32 %v430
          %vm448 = vweird.f32 %v441
          %vm449 = vmor %vm447, %vm448
          %v450 = vsel %vm449, %v441, %v446
          %v451 = vmul.f32 %v427, %v440
          %v452 = vmul.f32 %v428, %v450
          %v453 = vld [vmem:[#allocation7] sm:$0x1]
          %v455 = vperm.slane %v453, 0
          %v457 = vmul.f32 %v451, %v455
          %v458 = vmul.f32 %v452, %v455
          %v459 = vld [vmem:[%s2] sm:$0x1]
          %v461 = vperm.slane %v459, 0
          %v463 = vadd.f32 %v457, %v461
          %v464 = vadd.f32 %v458, %v461
          %v465 = vpack.c.bf16 %v463, %v463
          %v466 = vpack.c.bf16 %v464, %v464
          %467 = vst [vmem:[#allocation2] sm:$0xf] %v465
          %468 = vst [vmem:[#allocation2 + $0x4] sm:$0xf] %v466
          %469 = vst [vmem:[#allocation3] sm:$0xff] 0.0
          %470 = vst [vmem:[#allocation3 + $0x8] sm:$0xff] 0.0
        $region68: #{tpu_custom_call.1} parent=47 // pred_fallthru
          _
        %v471 = vld [vmem:[#allocation2] sm:$0xf]
        %v472 = vld [vmem:[#allocation2 + $0x4] sm:$0xf]
        %v473 = vld [vmem:[%s345] sm:$0xf]
        %v474 = vld [vmem:[%s345 + $0x4] sm:$0xf]
        %v475 = vld [vmem:[%s345 + $0x8] sm:$0xf]
        %v476 = vld [vmem:[%s345 + $0xc] sm:$0xf]
        %v477 = vld [vmem:[%s345 + $0x10] sm:$0xf]
        %v478 = vld [vmem:[%s345 + $0x14] sm:$0xf]
        %v479 = vld [vmem:[%s345 + $0x18] sm:$0xf]
        %v480 = vld [vmem:[%s345 + $0x1c] sm:$0xf]
        %v481 = vld [vmem:[%s345 + $0x20] sm:$0xf]
        %v482 = vld [vmem:[%s345 + $0x24] sm:$0xf]
        %v483 = vld [vmem:[%s345 + $0x28] sm:$0xf]
        %v484 = vld [vmem:[%s345 + $0x2c] sm:$0xf]
        %v485 = vld [vmem:[%s345 + $0x30] sm:$0xf]
        %v486 = vld [vmem:[%s345 + $0x34] sm:$0xf]
        %v487 = vld [vmem:[%s345 + $0x38] sm:$0xf]
        %v488 = vld [vmem:[%s345 + $0x3c] sm:$0xf]
        %v489 = vld [vmem:[%s393] sm:$0x1]
        %v491 = vperm.slane %v489, 0
        %v495 = vunpack.c.l.b16 %v471
        %v496 = vunpack.c.l.b16 %v472
        %v497 = vpack.c.b16 %v496, %v495
        %v515 = vunpack.c.l.b16 %v473
        %v516 = vunpack.c.l.b16 %v474
        %v517 = vunpack.c.l.b16 %v475
        %v518 = vunpack.c.l.b16 %v476
        %v519 = vunpack.c.l.b16 %v477
        %v520 = vunpack.c.l.b16 %v478
        %v521 = vunpack.c.l.b16 %v479
        %v522 = vunpack.c.l.b16 %v480
        %v523 = vunpack.c.l.b16 %v481
        %v524 = vunpack.c.l.b16 %v482
        %v525 = vunpack.c.l.b16 %v483
        %v526 = vunpack.c.l.b16 %v484
        %v527 = vunpack.c.l.b16 %v485
        %v528 = vunpack.c.l.b16 %v486
        %v529 = vunpack.c.l.b16 %v487
        %v530 = vunpack.c.l.b16 %v488
        %v531 = vpack.c.b16 %v516, %v515
        %v532 = vpack.c.b16 %v518, %v517
        %v533 = vpack.c.b16 %v520, %v519
        %v534 = vpack.c.b16 %v522, %v521
        %v535 = vpack.c.b16 %v524, %v523
        %v536 = vpack.c.b16 %v526, %v525
        %v537 = vpack.c.b16 %v528, %v527
        %v538 = vpack.c.b16 %v530, %v529
        %547 = vmatpush.bf16.msra.mxu0 %v538
        %548 = vmatpush.bf16.msra.mxu0 %v537
        %549 = vmatpush.bf16.msra.mxu0 %v536
        %550 = vmatpush.bf16.msra.mxu0 %v535
        %551 = vmatpush.bf16.msra.mxu0 %v534
        %552 = vmatpush.bf16.msra.mxu0 %v533
        %553 = vmatpush.bf16.msra.mxu0 %v532
        %554 = vmatpush.bf16.msra.mxu0 %v531
        %555 = vmatmul.bf16.gmra.mxu0 %v497
        %v556 = vpop.f32.mrf.mxu0
        %v557 = vadd.f32 %v491, %v556
        %v558 = vpop.f32.mrf.mxu0
        %v559 = vadd.f32 %v491, %v558
        %560 = vdwg.mxu0
        %v561 = vmul.f32 %v557, %v557
        %v562 = vmul.f32 %v559, %v559
        %v563 = vmul.f32 %v557, %v561
        %v564 = vmul.f32 %v559, %v562
        %v565 = vmul.f32 %v563, 0.044715
        %v566 = vmul.f32 %v564, 0.044715
        %v567 = vadd.f32 %v557, %v565
        %v568 = vadd.f32 %v559, %v566
        %v569 = vmul.f32 %v567, 0.7978846
        %v570 = vmul.f32 %v568, 0.7978846
        %v571 = vtanh.pop %v569
        %v572 = vtanh.pop %v570
        %v573 = vadd.f32 %v571, 1.0
        %v574 = vadd.f32 %v572, 1.0
        %v575 = vmul.f32 %v573, 0.5
        %v576 = vmul.f32 %v574, 0.5
        %v577 = vmul.f32 %v557, %v575
        %v578 = vmul.f32 %v559, %v576
        %v579 = vld [vmem:[#allocation3] sm:$0xff]
        %v580 = vld [vmem:[#allocation3 + $0x8] sm:$0xff]
        %v581 = vpack.c.bf16 %v578, %v577
        %v582 = vld [vmem:[%s355] sm:$0xf]
        %v583 = vld [vmem:[%s355 + $0x4] sm:$0xf]
        %v584 = vld [vmem:[%s355 + $0x8] sm:$0xf]
        %v585 = vld [vmem:[%s355 + $0xc] sm:$0xf]
        %v586 = vld [vmem:[%s355 + $0x10] sm:$0xf]
        %v587 = vld [vmem:[%s355 + $0x14] sm:$0xf]
        %v588 = vld [vmem:[%s355 + $0x18] sm:$0xf]
        %v589 = vld [vmem:[%s355 + $0x1c] sm:$0xf]
        %v590 = vld [vmem:[%s355 + $0x20] sm:$0xf]
        %v591 = vld [vmem:[%s355 + $0x24] sm:$0xf]
        %v592 = vld [vmem:[%s355 + $0x28] sm:$0xf]
        %v593 = vld [vmem:[%s355 + $0x2c] sm:$0xf]
        %v594 = vld [vmem:[%s355 + $0x30] sm:$0xf]
        %v595 = vld [vmem:[%s355 + $0x34] sm:$0xf]
        %v596 = vld [vmem:[%s355 + $0x38] sm:$0xf]
        %v597 = vld [vmem:[%s355 + $0x3c] sm:$0xf]
        %v614 = vunpack.c.l.b16 %v582
        %v615 = vunpack.c.l.b16 %v583
        %v616 = vunpack.c.l.b16 %v584
        %v617 = vunpack.c.l.b16 %v585
        %v618 = vunpack.c.l.b16 %v586
        %v619 = vunpack.c.l.b16 %v587
        %v620 = vunpack.c.l.b16 %v588
        %v621 = vunpack.c.l.b16 %v589
        %v622 = vunpack.c.l.b16 %v590
        %v623 = vunpack.c.l.b16 %v591
        %v624 = vunpack.c.l.b16 %v592
        %v625 = vunpack.c.l.b16 %v593
        %v626 = vunpack.c.l.b16 %v594
        %v627 = vunpack.c.l.b16 %v595
        %v628 = vunpack.c.l.b16 %v596
        %v629 = vunpack.c.l.b16 %v597
        %v630 = vpack.c.b16 %v615, %v614
        %v631 = vpack.c.b16 %v617, %v616
        %v632 = vpack.c.b16 %v619, %v618
        %v633 = vpack.c.b16 %v621, %v620
        %v634 = vpack.c.b16 %v623, %v622
        %v635 = vpack.c.b16 %v625, %v624
        %v636 = vpack.c.b16 %v627, %v626
        %v637 = vpack.c.b16 %v629, %v628
        %646 = vmatpush.bf16.msra.mxu0 %v637
        %647 = vmatpush.bf16.msra.mxu0 %v636
        %648 = vmatpush.bf16.msra.mxu0 %v635
        %649 = vmatpush.bf16.msra.mxu0 %v634
        %650 = vmatpush.bf16.msra.mxu0 %v633
        %651 = vmatpush.bf16.msra.mxu0 %v632
        %652 = vmatpush.bf16.msra.mxu0 %v631
        %653 = vmatpush.bf16.msra.mxu0 %v630
        %654 = vmatmul.bf16.gmra.mxu0 %v581
        %v655 = vpop.f32.mrf.mxu0
        %v656 = vadd.f32 0.0, %v655
        %v657 = vpop.f32.mrf.mxu0
        %v658 = vadd.f32 0.0, %v657
        %659 = vdwg.mxu0
        %v660 = vadd.f32 %v579, %v656
        %v661 = vadd.f32 %v580, %v658
        %662 = vst [vmem:[#allocation3] sm:$0xff] %v660
        %663 = vst [vmem:[#allocation3 + $0x8] sm:$0xff] %v661
        %p664 = scmp.eq.s32.totalorder %s26, 1
        // Predicated region
        $region69: #{tpu_custom_call.1} parent=47 // pred_check
          %p665 = pneg %p664
        $region70: #{tpu_custom_call.1} parent=47 // pred_check_branch
          %667 = sbr.rel (%p665) target = $region72
        $region71: #{tpu_custom_call.1} parent=47 // pred_region
          %v668 = vld [vmem:[#allocation3] sm:$0xff]
          %v669 = vld [vmem:[#allocation3 + $0x8] sm:$0xff]
          %v670 = vld [vmem:[%s6] sm:$0x1]
          %v672 = vperm.slane %v670, 0
          %v674 = vadd.f32 %v668, %v672
          %v675 = vadd.f32 %v669, %v672
          %676 = vst [vmem:[#allocation11] sm:$0xff] %v674
          %677 = vst [vmem:[#allocation11 + $0x8] sm:$0xff] %v675
        $region72: #{tpu_custom_call.1} parent=47 // pred_fallthru
          _
        // Predicated region
        $region73: #{tpu_custom_call.1} parent=47 // pred_check
          %p678 = pneg %p218
        $region74: #{tpu_custom_call.1} parent=47 // pred_check_branch
          %680 = sbr.rel (%p678) target = $region76
        $region75: #{tpu_custom_call.1} parent=47 // pred_region
          %s681 = smul.u32 2, %s25
          %683 = vsyncadd [#allocation6], 0
          %s684 = smul.addr %s681, 8
          %s685 = scalar_lea.hbm %s7, %s684
          %s686 = sshll.u32 [#allocation11], 4
          %s687 = int_to_ptr.vmem [resolvable:$true] %s686
          %s688 = sshll.u32 %s685, 4
          %s689 = int_to_ptr.hbm [resolvable:$true] %s688
          %694 = dma.vmem_to_hbm [thread:$0]  %s687, 256, %s689, [#allocation6], 128, 128, 8
        $region76: #{tpu_custom_call.1} parent=47 // pred_fallthru
          _
        // Predicated region
        $region77: #{tpu_custom_call.1} parent=47 // pred_check
          %p695 = pneg %p218
        $region78: #{tpu_custom_call.1} parent=47 // pred_check_branch
          %697 = sbr.rel (%p695) target = $region80
        $region79: #{tpu_custom_call.1} parent=47 // pred_region
          %699 = dma.done [#allocation6], 256
        $region80: #{tpu_custom_call.1} parent=47 // pred_fallthru
          _
      $region48: #{tpu_custom_call.1} parent=5 // pred_fallthru
        _
      %p700 = scmp.le.s32.totalorder 2, %s16
      // Predicated region
      $region81: #{tpu_custom_call.1} parent=5 // pred_check
        %p701 = pneg %p700
      $region82: #{tpu_custom_call.1} parent=5 // pred_check_branch
        %703 = sbr.rel (%p701) target = $region84
      $region83: #{tpu_custom_call.1} parent=5 // pred_region
        %s704 = ssub.s32 %s16, 2
      $region84: #{tpu_custom_call.1} parent=5 // pred_fallthru
        _
    $region6: #{tpu_custom_call.1} parent=1 // loop_footer
      %s20 = sadd.s32 1, %s16
    $region7: #{tpu_custom_call.1} parent=1 // loop_footer_branch
      %15 = sbr.rel target = $region3
    $region8: #{tpu_custom_call.1} parent=1 // loop_exit
      _
    %705 = vsyncpa [#allocation5], 1
    %s706 = scalar_lea.sflag [#allocation5], 1
    %707 = vsyncpa %s706, 1
    %708 = vsyncpa [#allocation8], 1
    %709 = vsyncpa [#allocation6], 1
    %s710 = scalar_lea.sflag [#allocation6], 1
    %711 = vsyncpa %s710, 1

</llo_original>
